<compile_context>
chip_gen: v7x
topology: tpu7x:2x2x1
jax: 0.10.0
libtpu: 0.0.40
codegen_flags: <defaults>
</compile_context>

<pallas_src>
import math

import jax
import jax.numpy as jnp
from jax.experimental import pallas as pl
from jax.experimental.pallas import tpu as pltpu


def _vmem():
    return pl.BlockSpec(memory_space=pltpu.MemorySpace.VMEM)


# ---------------------------------------------------------------------------
# Kernel 1: fc1 = nn.Linear(72*F, node_n*F)  (lane-dense (B, N*F) output)
# ---------------------------------------------------------------------------
def _fc1_kernel(x_ref, w_ref, b_ref, o_ref):
    o_ref[...] = (
        jnp.dot(x_ref[...], w_ref[...], preferred_element_type=jnp.float32)
        + b_ref[...]
    )


def _fc1(x_flat, w, b):
    return pl.pallas_call(
        _fc1_kernel,
        out_shape=jax.ShapeDtypeStruct((x_flat.shape[0], w.shape[1]), jnp.float32),
        in_specs=[_vmem()] * 3,
        out_specs=_vmem(),
    )(x_flat, w, b)


# ---------------------------------------------------------------------------
# Kernel 2: gc1 -> bn1 -> tanh -> [GC_Block]*num_stage -> gc7 -> + x0 (fused)
# ---------------------------------------------------------------------------
def _graph_conv(y, w, att_bd, bias):
    # y: (B*N, Fin); w: (Fin, Fout); att_bd: (B*N, B*N) = kron(I_B, att);
    # bias: (1, Fout).  One flattened matmul per contraction, bias added once.
    t = jnp.dot(y, w, preferred_element_type=jnp.float32)
    t = jnp.dot(att_bd, t, preferred_element_type=jnp.float32)
    return t + bias


def _bn_tanh(y, gamma, beta, B, N, F, eps=1e-5):
    # nn.BatchNorm1d(N*F): training-mode batch statistics (biased variance),
    # affine fused into a single scale/shift, then tanh.
    y3 = y.reshape(B, N, F)                       # leading-dim split: layout-preserving
    mean = jnp.mean(y3, axis=0, keepdims=True)    # per-(n,f) stats over the batch
    d = y3 - mean
    var = jnp.mean(d * d, axis=0, keepdims=True)
    scale = jax.lax.rsqrt(var + eps) * gamma[None]
    out = jnp.tanh(d * scale + beta[None])
    # TODO(synk): nn.Dropout(p) is stochastic in training; identity (eval) path here.
    return out.reshape(B * N, F)


def _make_trunk_kernel(B, N, hidden, num_stage):
    def kernel(*refs):
        idx = 0

        def take():
            nonlocal idx
            r = refs[idx]
            idx += 1
            return r

        x0 = take()[...]                                        # (B*N, Fin)

        # gc1 -> bn1 -> tanh (-> dropout identity)
        w, a, b = take()[...], take()[...], take()[...]
        g, be = take()[...], take()[...]
        y = _bn_tanh(_graph_conv(x0, w, a, b), g, be, B, N, hidden)

        # residual GC_Blocks
        for _ in range(num_stage):
            r_in = y
            for _ in range(2):                                  # gc1/bn1 then gc2/bn2
                w, a, b = take()[...], take()[...], take()[...]
                g, be = take()[...], take()[...]
                y = _bn_tanh(_graph_conv(y, w, a, b), g, be, B, N, hidden)
            y = y + r_in

        # gc7 + residual connection to the fc1 output
        w, a, b = take()[...], take()[...], take()[...]
        o_ref = take()
        o_ref[...] = _graph_conv(y, w, a, b) + x0

    return kernel


def gcn_pose_forward(x, params):
    """x: (B, 72, input_feature) f32 -> (B, node_n, input_feature) f32."""
    B, S, Fin = x.shape
    node_n = params["gc1_att"].shape[0]
    hidden = params["gc1_w"].shape[1]
    num_stage = len(params["blocks"])

    # fc1 on the flattened input; lane-dense (B, N*Fin) output, then a free
    # row-major reshape (layout plumbing) into the (B*N, Fin) trunk layout.
    x_flat = x.reshape(B, S * Fin)
    x0 = _fc1(x_flat, params["fc1_w"], params["fc1_b"]).reshape(B * node_n, Fin)

    # Lift every att to a block-diagonal (B*N, B*N) operator so the node
    # contraction is a single 2-D MXU matmul inside the kernel (no transposes).
    eye_b = jnp.eye(B, dtype=jnp.float32)
    lift = lambda att: jnp.kron(eye_b, att)

    args = [x0,
            params["gc1_w"], lift(params["gc1_att"]), params["gc1_b"],
            params["bn1_g"], params["bn1_b"]]
    for blk in params["blocks"]:
        args += [blk["gc1_w"], lift(blk["gc1_att"]), blk["gc1_b"],
                 blk["bn1_g"], blk["bn1_b"],
                 blk["gc2_w"], lift(blk["gc2_att"]), blk["gc2_b"],
                 blk["bn2_g"], blk["bn2_b"]]
    args += [params["gc7_w"], lift(params["gc7_att"]), params["gc7_b"]]

    out = pl.pallas_call(
        _make_trunk_kernel(B, node_n, hidden, num_stage),
        out_shape=jax.ShapeDtypeStruct((B * node_n, Fin), jnp.float32),
        in_specs=[_vmem()] * len(args),
        out_specs=_vmem(),
    )(*args)
    return out.reshape(B, node_n, Fin)


# ---------------------------------------------------------------------------
# Parameters (shapes mirror the PyTorch module; weights stored (in, out))
# ---------------------------------------------------------------------------
def init_params(key, input_feature, hidden_feature, node_n, num_stage):
    def nk():
        nonlocal key
        key, sub = jax.random.split(key)
        return sub

    def uniform(shape, bound):
        return jax.random.uniform(nk(), shape, jnp.float32, -bound, bound)

    def graph_conv(in_f, out_f):
        stdv = 1.0 / math.sqrt(out_f)          # GraphConvolution.reset_parameters
        return {"w": uniform((in_f, out_f), stdv),
                "att": uniform((node_n, node_n), stdv),
                "b": uniform((1, out_f), stdv)}

    def bn(feat):
        # BatchNorm1d(node_n*feat) affine params stored (node_n, feat)
        # (channel index n*feat + f).  Randomized to exercise the affine path.
        return {"g": 1.0 + 0.1 * jax.random.normal(nk(), (node_n, feat), jnp.float32),
                "b": 0.1 * jax.random.normal(nk(), (node_n, feat), jnp.float32)}

    kfc = 1.0 / math.sqrt(72 * input_feature)
    gc1, bn1 = graph_conv(input_feature, hidden_feature), bn(hidden_feature)
    gc7 = graph_conv(hidden_feature, input_feature)

    blocks = []
    for _ in range(num_stage):
        g1, n1 = graph_conv(hidden_feature, hidden_feature), bn(hidden_feature)
        g2, n2 = graph_conv(hidden_feature, hidden_feature), bn(hidden_feature)
        blocks.append({"gc1_w": g1["w"], "gc1_att": g1["att"], "gc1_b": g1["b"],
                       "bn1_g": n1["g"], "bn1_b": n1["b"],
                       "gc2_w": g2["w"], "gc2_att": g2["att"], "gc2_b": g2["b"],
                       "bn2_g": n2["g"], "bn2_b": n2["b"]})

    return {"fc1_w": uniform((72 * input_feature, node_n * input_feature), kfc),
            "fc1_b": uniform((1, node_n * input_feature), kfc),
            "gc1_w": gc1["w"], "gc1_att": gc1["att"], "gc1_b": gc1["b"],
            "bn1_g": bn1["g"], "bn1_b": bn1["b"],
            "blocks": blocks,
            "gc7_w": gc7["w"], "gc7_att": gc7["att"], "gc7_b": gc7["b"]}


# ---------------------------------------------------------------------------
# Pure-JAX reference mirroring the PyTorch forward (high-precision matmuls)
# ---------------------------------------------------------------------------
def gcn_pose_ref(x, params):
    hi = jax.lax.Precision.HIGHEST
    B, S, Fin = x.shape
    node_n = params["gc1_att"].shape[0]

    def gc(inp, w, att, b):
        y = jnp.einsum("bnf,fg->bng", inp, w, precision=hi)
        y = jnp.einsum("mn,bng->bmg", att, y, precision=hi)
        return y + b

    def bn_tanh(y, g, be, eps=1e-5):
        mean = jnp.mean(y, axis=0, keepdims=True)
        d = y - mean
        var = jnp.mean(d * d, axis=0, keepdims=True)
        return jnp.tanh(d * jax.lax.rsqrt(var + eps) * g[None] + be[None])

    x0 = (jnp.dot(x.reshape(B, S * Fin), params["fc1_w"], precision=hi)
          + params["fc1_b"]).reshape(B, node_n, Fin)
    y = bn_tanh(gc(x0, params["gc1_w"], params["gc1_att"], params["gc1_b"]),
                params["bn1_g"], params["bn1_b"])
    for blk in params["blocks"]:
        r = y
        y = bn_tanh(gc(y, blk["gc1_w"], blk["gc1_att"], blk["gc1_b"]),
                    blk["bn1_g"], blk["bn1_b"])
        y = bn_tanh(gc(y, blk["gc2_w"], blk["gc2_att"], blk["gc2_b"]),
                    blk["bn2_g"], blk["bn2_b"])
        y = y + r
    y = gc(y, params["gc7_w"], params["gc7_att"], params["gc7_b"])
    return y + x0


if __name__ == "__main__":
    B = 8                  # batch (folds into the matmul M dimension)
    INPUT_FEATURE = 8      # per-node feature dim (fc1 input is 72*INPUT_FEATURE)
    HIDDEN_FEATURE = 128   # trunk width: multiple of 128 -> lane-dense elementwise
    NODE_N = 48
    NUM_STAGE = 2

    key = jax.random.PRNGKey(0)
    kx, kp = jax.random.split(key)
    x = jax.random.normal(kx, (B, 72, INPUT_FEATURE), jnp.float32)
    params = init_params(kp, INPUT_FEATURE, HIDDEN_FEATURE, NODE_N, NUM_STAGE)

    out = jax.block_until_ready(gcn_pose_forward(x, params))
    ref = gcn_pose_ref(x, params)

    assert out.shape == (B, NODE_N, INPUT_FEATURE), out.shape
    err = float(jnp.max(jnp.abs(out - ref)))
    # BN's 1/sqrt(var) amplifies matmul rounding differences; tolerance sized for
    # f32 MXU vs XLA-highest matmuls at B=8 (previous failure was B=2 + 1e-4 atol).
    assert jnp.allclose(out, ref, atol=5e-3, rtol=5e-3), err
    print("KERNEL_OK")
</pallas_src>

<mosaic_0001>
module attributes {stable_mosaic.version = 11 : i64} {
  func.func @_fc1_kernel(%arg0: memref<8x576xf32, #tpu.memory_space<vmem>>, %arg1: memref<576x384xf32, #tpu.memory_space<vmem>>, %arg2: memref<1x384xf32, #tpu.memory_space<vmem>>, %arg3: memref<8x384xf32, #tpu.memory_space<vmem>>) attributes {dimension_semantics = [], scalar_prefetch = 0 : i64, scratch_operands = 0 : i64, tpu.core_type = #tpu.core_type<tc>} {
    %c0 = arith.constant 0 : index
    %c0_0 = arith.constant 0 : index
    %0 = vector.load %arg0[%c0, %c0_0] : memref<8x576xf32, #tpu.memory_space<vmem>>, vector<8x576xf32>
    %c0_1 = arith.constant 0 : index
    %c0_2 = arith.constant 0 : index
    %1 = vector.load %arg1[%c0_1, %c0_2] : memref<576x384xf32, #tpu.memory_space<vmem>>, vector<576x384xf32>
    %cst = arith.constant dense<0.000000e+00> : vector<8x384xf32>
    %2 = tpu.matmul %0, %1, %cst {dimension_numbers = #tpu.dot_dimension_numbers<[1], [0], [0], [1], [0, 0, 1, 1], [], []>} : vector<8x576xf32>, vector<576x384xf32>, vector<8x384xf32> -> vector<8x384xf32>
    %c0_3 = arith.constant 0 : index
    %c0_4 = arith.constant 0 : index
    %3 = vector.load %arg2[%c0_3, %c0_4] : memref<1x384xf32, #tpu.memory_space<vmem>>, vector<1x384xf32>
    %4 = vector.broadcast %3 : vector<1x384xf32> to vector<8x384xf32>
    %5 = arith.addf %2, %4 : vector<8x384xf32>
    %c0_5 = arith.constant 0 : index
    %c0_6 = arith.constant 0 : index
    %6 = vector.load %arg3[%c0_5, %c0_6] : memref<8x384xf32, #tpu.memory_space<vmem>>, vector<8x384xf32>
    tpu.vector_store %arg3[%c0_5, %c0_6], %5 {strides = array<i32>} : memref<8x384xf32, #tpu.memory_space<vmem>>, vector<8x384xf32>,
    return
  }
}

</mosaic_0001>

<llo_original>
// kernel: tpu_custom_call.1
$region0: #{tpu_custom_call.1}
  #allocation0 [shape = 'u32[]', space=smem, size = 0x4, offset = 0x4, fixed_abs, tag = 'smem constant byte address 0x4 - core index']
  #allocation1 [shape = 'u32[144,128]{1,0:T(1,128)}', space=vmem, size = 0x12000, scoped, tag = 'internal scratch']
  %s0 = inlined_call_operand.hbm [shape: f32[8,576], index: 0, kind: input, shape index: {}]
  %s1 = inlined_call_operand.hbm [shape: f32[576,384], index: 1, kind: input, shape index: {}]
  %s2 = inlined_call_operand.vmem [shape: f32[1,384], index: 2, kind: input, shape index: {}]
  %s3 = inlined_call_operand.hbm [shape: f32[8,384], index: 3, kind: output, shape index: {}]
  %s4 = sld [smem:[#allocation0]]
  $region30: #{tpu_custom_call.1} parent=0
    _
  %s6 = ssub.s32 1, %s4
  %s7 = scalar_select 0, %s6, %s4
  $region1: #{tpu_custom_call.1} parent=0
    #allocation2 [shape = 'u8[20480]{0}', space=vmem, size = 0x5000, scoped, tag = 'input window, operand 0, single buffered']
    #allocation3 [shape = 's32[1]{0}', space=sflag, size = 0x4, scoped, tag = 'scoped memory for tpu_custom_call.1']
    #allocation4 [shape = 's32[1]{0}', space=sflag, size = 0x4, scoped, tag = 'scoped memory for tpu_custom_call.1']
    #allocation5 [shape = 'u8[884736]{0}', space=vmem, size = 0xd8000, scoped, tag = 'input window, operand 1, single buffered']
    #allocation6 [shape = 's32[1]{0}', space=sflag, size = 0x4, scoped, tag = 'scoped memory for tpu_custom_call.1']
    #allocation7 [shape = 'u8[12288]{0}', space=vmem, size = 0x3000, scoped, tag = 'output window, operand 0, single buffered']
    %8 = vsyncpa [#allocation3], 0
    %9 = vsyncpa [#allocation6], 0
    %10 = vsyncpa [#allocation4], 0
    // Predicated region
    $region2: #{tpu_custom_call.1} parent=1 // pred_check
      _
    $region3: #{tpu_custom_call.1} parent=1 // pred_check_branch
      %12 = sbr.rel (0) target = $region5
    $region4: #{tpu_custom_call.1} parent=1 // pred_region
      %s14 = ssub.s32 640, 640
      %15 = vsyncadd [#allocation3], %s14
      %s17 = sshll.u32 [#allocation2], 4
      %s18 = int_to_ptr.vmem [resolvable:$true] %s17
      %20 = dma.hbm_to_vmem [thread:$0]  %s0, 640, %s18, [#allocation3]
    $region5: #{tpu_custom_call.1} parent=1 // pred_fallthru
      _
    // Predicated region
    $region6: #{tpu_custom_call.1} parent=1 // pred_check
      _
    $region7: #{tpu_custom_call.1} parent=1 // pred_check_branch
      %22 = sbr.rel (0) target = $region9
    $region8: #{tpu_custom_call.1} parent=1 // pred_region
      %s24 = ssub.s32 27648, 27648
      %25 = vsyncadd [#allocation6], %s24
      %s26 = sshll.u32 [#allocation5], 4
      %s27 = int_to_ptr.vmem [resolvable:$true] %s26
      %32 = dma.hbm_to_vmem [thread:$0]  %s1, 27648, %s27, [#allocation6], 384, 384, 24
    $region9: #{tpu_custom_call.1} parent=1 // pred_fallthru
      _
    // Predicated region
    $region10: #{tpu_custom_call.1} parent=1 // pred_check
      _
    $region11: #{tpu_custom_call.1} parent=1 // pred_check_branch
      %34 = sbr.rel (0) target = $region13
    $region12: #{tpu_custom_call.1} parent=1 // pred_region
      _
    $region13: #{tpu_custom_call.1} parent=1 // pred_fallthru
      _
    // Predicated region
    $region14: #{tpu_custom_call.1} parent=1 // pred_check
      _
    $region15: #{tpu_custom_call.1} parent=1 // pred_check_branch
      %36 = sbr.rel (0) target = $region17
    $region16: #{tpu_custom_call.1} parent=1 // pred_region
      %37 = dma.done [#allocation3], 640
    $region17: #{tpu_custom_call.1} parent=1 // pred_fallthru
      _
    // Predicated region
    $region18: #{tpu_custom_call.1} parent=1 // pred_check
      _
    $region19: #{tpu_custom_call.1} parent=1 // pred_check_branch
      %39 = sbr.rel (0) target = $region21
    $region20: #{tpu_custom_call.1} parent=1 // pred_region
      %40 = dma.done [#allocation6], 27648
    $region21: #{tpu_custom_call.1} parent=1 // pred_fallthru
      _
    %v41 = vld [vmem:[#allocation2] sm:$0xff]
    %v42 = vld [vmem:[#allocation2 + $0x8] sm:$0xff]
    %v43 = vld [vmem:[#allocation2 + $0x10] sm:$0xff]
    %v44 = vld [vmem:[#allocation2 + $0x18] sm:$0xff]
    %v45 = vld [vmem:[#allocation2 + $0x20] sm:$0xff]
    %v46 = vld [vmem:[#allocation5] sm:$0xff]
    %v47 = vld [vmem:[#allocation5 + $0x8] sm:$0xff]
    %v48 = vld [vmem:[#allocation5 + $0x10] sm:$0xff]
    %v49 = vld [vmem:[#allocation5 + $0x18] sm:$0xff]
    %v50 = vld [vmem:[#allocation5 + $0x20] sm:$0xff]
    %v51 = vld [vmem:[#allocation5 + $0x28] sm:$0xff]
    %v52 = vld [vmem:[#allocation5 + $0x30] sm:$0xff]
    %v53 = vld [vmem:[#allocation5 + $0x38] sm:$0xff]
    %v54 = vld [vmem:[#allocation5 + $0x40] sm:$0xff]
    %v55 = vld [vmem:[#allocation5 + $0x48] sm:$0xff]
    %v56 = vld [vmem:[#allocation5 + $0x50] sm:$0xff]
    %v57 = vld [vmem:[#allocation5 + $0x58] sm:$0xff]
    %v58 = vld [vmem:[#allocation5 + $0x60] sm:$0xff]
    %v59 = vld [vmem:[#allocation5 + $0x68] sm:$0xff]
    %v60 = vld [vmem:[#allocation5 + $0x70] sm:$0xff]
    %v61 = vld [vmem:[#allocation5 + $0x78] sm:$0xff]
    %v62 = vld [vmem:[#allocation5 + $0x80] sm:$0xff]
    %v63 = vld [vmem:[#allocation5 + $0x88] sm:$0xff]
    %v64 = vld [vmem:[#allocation5 + $0x90] sm:$0xff]
    %v65 = vld [vmem:[#allocation5 + $0x98] sm:$0xff]
    %v66 = vld [vmem:[#allocation5 + $0xa0] sm:$0xff]
    %v67 = vld [vmem:[#allocation5 + $0xa8] sm:$0xff]
    %v68 = vld [vmem:[#allocation5 + $0xb0] sm:$0xff]
    %v69 = vld [vmem:[#allocation5 + $0xb8] sm:$0xff]
    %v70 = vld [vmem:[#allocation5 + $0xc0] sm:$0xff]
    %v71 = vld [vmem:[#allocation5 + $0xc8] sm:$0xff]
    %v72 = vld [vmem:[#allocation5 + $0xd0] sm:$0xff]
    %v73 = vld [vmem:[#allocation5 + $0xd8] sm:$0xff]
    %v74 = vld [vmem:[#allocation5 + $0xe0] sm:$0xff]
    %v75 = vld [vmem:[#allocation5 + $0xe8] sm:$0xff]
    %v76 = vld [vmem:[#allocation5 + $0xf0] sm:$0xff]
    %v77 = vld [vmem:[#allocation5 + $0xf8] sm:$0xff]
    %v78 = vld [vmem:[#allocation5 + $0x100] sm:$0xff]
    %v79 = vld [vmem:[#allocation5 + $0x108] sm:$0xff]
    %v80 = vld [vmem:[#allocation5 + $0x110] sm:$0xff]
    %v81 = vld [vmem:[#allocation5 + $0x118] sm:$0xff]
    %v82 = vld [vmem:[#allocation5 + $0x120] sm:$0xff]
    %v83 = vld [vmem:[#allocation5 + $0x128] sm:$0xff]
    %v84 = vld [vmem:[#allocation5 + $0x130] sm:$0xff]
    %v85 = vld [vmem:[#allocation5 + $0x138] sm:$0xff]
    %v86 = vld [vmem:[#allocation5 + $0x140] sm:$0xff]
    %v87 = vld [vmem:[#allocation5 + $0x148] sm:$0xff]
    %v88 = vld [vmem:[#allocation5 + $0x150] sm:$0xff]
    %v89 = vld [vmem:[#allocation5 + $0x158] sm:$0xff]
    %v90 = vld [vmem:[#allocation5 + $0x160] sm:$0xff]
    %v91 = vld [vmem:[#allocation5 + $0x168] sm:$0xff]
    %v92 = vld [vmem:[#allocation5 + $0x170] sm:$0xff]
    %v93 = vld [vmem:[#allocation5 + $0x178] sm:$0xff]
    %v94 = vld [vmem:[#allocation5 + $0x180] sm:$0xff]
    %v95 = vld [vmem:[#allocation5 + $0x188] sm:$0xff]
    %v96 = vld [vmem:[#allocation5 + $0x190] sm:$0xff]
    %v97 = vld [vmem:[#allocation5 + $0x198] sm:$0xff]
    %v98 = vld [vmem:[#allocation5 + $0x1a0] sm:$0xff]
    %v99 = vld [vmem:[#allocation5 + $0x1a8] sm:$0xff]
    %v100 = vld [vmem:[#allocation5 + $0x1b0] sm:$0xff]
    %v101 = vld [vmem:[#allocation5 + $0x1b8] sm:$0xff]
    %v102 = vld [vmem:[#allocation5 + $0x1c0] sm:$0xff]
    %v103 = vld [vmem:[#allocation5 + $0x1c8] sm:$0xff]
    %v104 = vld [vmem:[#allocation5 + $0x1d0] sm:$0xff]
    %v105 = vld [vmem:[#allocation5 + $0x1d8] sm:$0xff]
    %v106 = vld [vmem:[#allocation5 + $0x1e0] sm:$0xff]
    %v107 = vld [vmem:[#allocation5 + $0x1e8] sm:$0xff]
    %v108 = vld [vmem:[#allocation5 + $0x1f0] sm:$0xff]
    %v109 = vld [vmem:[#allocation5 + $0x1f8] sm:$0xff]
    %v110 = vld [vmem:[#allocation5 + $0x200] sm:$0xff]
    %v111 = vld [vmem:[#allocation5 + $0x208] sm:$0xff]
    %v112 = vld [vmem:[#allocation5 + $0x210] sm:$0xff]
    %v113 = vld [vmem:[#allocation5 + $0x218] sm:$0xff]
    %v114 = vld [vmem:[#allocation5 + $0x220] sm:$0xff]
    %v115 = vld [vmem:[#allocation5 + $0x228] sm:$0xff]
    %v116 = vld [vmem:[#allocation5 + $0x230] sm:$0xff]
    %v117 = vld [vmem:[#allocation5 + $0x238] sm:$0xff]
    %v118 = vld [vmem:[#allocation5 + $0x240] sm:$0xff]
    %v119 = vld [vmem:[#allocation5 + $0x248] sm:$0xff]
    %v120 = vld [vmem:[#allocation5 + $0x250] sm:$0xff]
    %v121 = vld [vmem:[#allocation5 + $0x258] sm:$0xff]
    %v122 = vld [vmem:[#allocation5 + $0x260] sm:$0xff]
    %v123 = vld [vmem:[#allocation5 + $0x268] sm:$0xff]
    %v124 = vld [vmem:[#allocation5 + $0x270] sm:$0xff]
    %v125 = vld [vmem:[#allocation5 + $0x278] sm:$0xff]
    %v126 = vld [vmem:[#allocation5 + $0x280] sm:$0xff]
    %v127 = vld [vmem:[#allocation5 + $0x288] sm:$0xff]
    %v128 = vld [vmem:[#allocation5 + $0x290] sm:$0xff]
    %v129 = vld [vmem:[#allocation5 + $0x298] sm:$0xff]
    %v130 = vld [vmem:[#allocation5 + $0x2a0] sm:$0xff]
    %v131 = vld [vmem:[#allocation5 + $0x2a8] sm:$0xff]
    %v132 = vld [vmem:[#allocation5 + $0x2b0] sm:$0xff]
    %v133 = vld [vmem:[#allocation5 + $0x2b8] sm:$0xff]
    %v134 = vld [vmem:[#allocation5 + $0x2c0] sm:$0xff]
    %v135 = vld [vmem:[#allocation5 + $0x2c8] sm:$0xff]
    %v136 = vld [vmem:[#allocation5 + $0x2d0] sm:$0xff]
    %v137 = vld [vmem:[#allocation5 + $0x2d8] sm:$0xff]
    %v138 = vld [vmem:[#allocation5 + $0x2e0] sm:$0xff]
    %v139 = vld [vmem:[#allocation5 + $0x2e8] sm:$0xff]
    %v140 = vld [vmem:[#allocation5 + $0x2f0] sm:$0xff]
    %v141 = vld [vmem:[#allocation5 + $0x2f8] sm:$0xff]
    %v142 = vld [vmem:[#allocation5 + $0x300] sm:$0xff]
    %v143 = vld [vmem:[#allocation5 + $0x308] sm:$0xff]
    %v144 = vld [vmem:[#allocation5 + $0x310] sm:$0xff]
    %v145 = vld [vmem:[#allocation5 + $0x318] sm:$0xff]
    %v146 = vld [vmem:[#allocation5 + $0x320] sm:$0xff]
    %v147 = vld [vmem:[#allocation5 + $0x328] sm:$0xff]
    %v148 = vld [vmem:[#allocation5 + $0x330] sm:$0xff]
    %v149 = vld [vmem:[#allocation5 + $0x338] sm:$0xff]
    %v150 = vld [vmem:[#allocation5 + $0x340] sm:$0xff]
    %v151 = vld [vmem:[#allocation5 + $0x348] sm:$0xff]
    %v152 = vld [vmem:[#allocation5 + $0x350] sm:$0xff]
    %v153 = vld [vmem:[#allocation5 + $0x358] sm:$0xff]
    %v154 = vld [vmem:[#allocation5 + $0x360] sm:$0xff]
    %v155 = vld [vmem:[#allocation5 + $0x368] sm:$0xff]
    %v156 = vld [vmem:[#allocation5 + $0x370] sm:$0xff]
    %v157 = vld [vmem:[#allocation5 + $0x378] sm:$0xff]
    %v158 = vld [vmem:[#allocation5 + $0x380] sm:$0xff]
    %v159 = vld [vmem:[#allocation5 + $0x388] sm:$0xff]
    %v160 = vld [vmem:[#allocation5 + $0x390] sm:$0xff]
    %v161 = vld [vmem:[#allocation5 + $0x398] sm:$0xff]
    %v162 = vld [vmem:[#allocation5 + $0x3a0] sm:$0xff]
    %v163 = vld [vmem:[#allocation5 + $0x3a8] sm:$0xff]
    %v164 = vld [vmem:[#allocation5 + $0x3b0] sm:$0xff]
    %v165 = vld [vmem:[#allocation5 + $0x3b8] sm:$0xff]
    %v166 = vld [vmem:[#allocation5 + $0x3c0] sm:$0xff]
    %v167 = vld [vmem:[#allocation5 + $0x3c8] sm:$0xff]
    %v168 = vld [vmem:[#allocation5 + $0x3d0] sm:$0xff]
    %v169 = vld [vmem:[#allocation5 + $0x3d8] sm:$0xff]
    %v170 = vld [vmem:[#allocation5 + $0x3e0] sm:$0xff]
    %v171 = vld [vmem:[#allocation5 + $0x3e8] sm:$0xff]
    %v172 = vld [vmem:[#allocation5 + $0x3f0] sm:$0xff]
    %v173 = vld [vmem:[#allocation5 + $0x3f8] sm:$0xff]
    %v174 = vld [vmem:[#allocation5 + $0x400] sm:$0xff]
    %v175 = vld [vmem:[#allocation5 + $0x408] sm:$0xff]
    %v176 = vld [vmem:[#allocation5 + $0x410] sm:$0xff]
    %v177 = vld [vmem:[#allocation5 + $0x418] sm:$0xff]
    %v178 = vld [vmem:[#allocation5 + $0x420] sm:$0xff]
    %v179 = vld [vmem:[#allocation5 + $0x428] sm:$0xff]
    %v180 = vld [vmem:[#allocation5 + $0x430] sm:$0xff]
    %v181 = vld [vmem:[#allocation5 + $0x438] sm:$0xff]
    %v182 = vld [vmem:[#allocation5 + $0x440] sm:$0xff]
    %v183 = vld [vmem:[#allocation5 + $0x448] sm:$0xff]
    %v184 = vld [vmem:[#allocation5 + $0x450] sm:$0xff]
    %v185 = vld [vmem:[#allocation5 + $0x458] sm:$0xff]
    %v186 = vld [vmem:[#allocation5 + $0x460] sm:$0xff]
    %v187 = vld [vmem:[#allocation5 + $0x468] sm:$0xff]
    %v188 = vld [vmem:[#allocation5 + $0x470] sm:$0xff]
    %v189 = vld [vmem:[#allocation5 + $0x478] sm:$0xff]
    %v190 = vld [vmem:[#allocation5 + $0x480] sm:$0xff]
    %v191 = vld [vmem:[#allocation5 + $0x488] sm:$0xff]
    %v192 = vld [vmem:[#allocation5 + $0x490] sm:$0xff]
    %v193 = vld [vmem:[#allocation5 + $0x498] sm:$0xff]
    %v194 = vld [vmem:[#allocation5 + $0x4a0] sm:$0xff]
    %v195 = vld [vmem:[#allocation5 + $0x4a8] sm:$0xff]
    %v196 = vld [vmem:[#allocation5 + $0x4b0] sm:$0xff]
    %v197 = vld [vmem:[#allocation5 + $0x4b8] sm:$0xff]
    %v198 = vld [vmem:[#allocation5 + $0x4c0] sm:$0xff]
    %v199 = vld [vmem:[#allocation5 + $0x4c8] sm:$0xff]
    %v200 = vld [vmem:[#allocation5 + $0x4d0] sm:$0xff]
    %v201 = vld [vmem:[#allocation5 + $0x4d8] sm:$0xff]
    %v202 = vld [vmem:[#allocation5 + $0x4e0] sm:$0xff]
    %v203 = vld [vmem:[#allocation5 + $0x4e8] sm:$0xff]
    %v204 = vld [vmem:[#allocation5 + $0x4f0] sm:$0xff]
    %v205 = vld [vmem:[#allocation5 + $0x4f8] sm:$0xff]
    %v206 = vld [vmem:[#allocation5 + $0x500] sm:$0xff]
    %v207 = vld [vmem:[#allocation5 + $0x508] sm:$0xff]
    %v208 = vld [vmem:[#allocation5 + $0x510] sm:$0xff]
    %v209 = vld [vmem:[#allocation5 + $0x518] sm:$0xff]
    %v210 = vld [vmem:[#allocation5 + $0x520] sm:$0xff]
    %v211 = vld [vmem:[#allocation5 + $0x528] sm:$0xff]
    %v212 = vld [vmem:[#allocation5 + $0x530] sm:$0xff]
    %v213 = vld [vmem:[#allocation5 + $0x538] sm:$0xff]
    %v214 = vld [vmem:[#allocation5 + $0x540] sm:$0xff]
    %v215 = vld [vmem:[#allocation5 + $0x548] sm:$0xff]
    %v216 = vld [vmem:[#allocation5 + $0x550] sm:$0xff]
    %v217 = vld [vmem:[#allocation5 + $0x558] sm:$0xff]
    %v218 = vld [vmem:[#allocation5 + $0x560] sm:$0xff]
    %v219 = vld [vmem:[#allocation5 + $0x568] sm:$0xff]
    %v220 = vld [vmem:[#allocation5 + $0x570] sm:$0xff]
    %v221 = vld [vmem:[#allocation5 + $0x578] sm:$0xff]
    %v222 = vld [vmem:[#allocation5 + $0x580] sm:$0xff]
    %v223 = vld [vmem:[#allocation5 + $0x588] sm:$0xff]
    %v224 = vld [vmem:[#allocation5 + $0x590] sm:$0xff]
    %v225 = vld [vmem:[#allocation5 + $0x598] sm:$0xff]
    %v226 = vld [vmem:[#allocation5 + $0x5a0] sm:$0xff]
    %v227 = vld [vmem:[#allocation5 + $0x5a8] sm:$0xff]
    %v228 = vld [vmem:[#allocation5 + $0x5b0] sm:$0xff]
    %v229 = vld [vmem:[#allocation5 + $0x5b8] sm:$0xff]
    %v230 = vld [vmem:[#allocation5 + $0x5c0] sm:$0xff]
    %v231 = vld [vmem:[#allocation5 + $0x5c8] sm:$0xff]
    %v232 = vld [vmem:[#allocation5 + $0x5d0] sm:$0xff]
    %v233 = vld [vmem:[#allocation5 + $0x5d8] sm:$0xff]
    %v234 = vld [vmem:[#allocation5 + $0x5e0] sm:$0xff]
    %v235 = vld [vmem:[#allocation5 + $0x5e8] sm:$0xff]
    %v236 = vld [vmem:[#allocation5 + $0x5f0] sm:$0xff]
    %v237 = vld [vmem:[#allocation5 + $0x5f8] sm:$0xff]
    %v238 = vld [vmem:[#allocation5 + $0x600] sm:$0xff]
    %v239 = vld [vmem:[#allocation5 + $0x608] sm:$0xff]
    %v240 = vld [vmem:[#allocation5 + $0x610] sm:$0xff]
    %v241 = vld [vmem:[#allocation5 + $0x618] sm:$0xff]
    %v242 = vld [vmem:[#allocation5 + $0x620] sm:$0xff]
    %v243 = vld [vmem:[#allocation5 + $0x628] sm:$0xff]
    %v244 = vld [vmem:[#allocation5 + $0x630] sm:$0xff]
    %v245 = vld [vmem:[#allocation5 + $0x638] sm:$0xff]
    %v246 = vld [vmem:[#allocation5 + $0x640] sm:$0xff]
    %v247 = vld [vmem:[#allocation5 + $0x648] sm:$0xff]
    %v248 = vld [vmem:[#allocation5 + $0x650] sm:$0xff]
    %v249 = vld [vmem:[#allocation5 + $0x658] sm:$0xff]
    %v250 = vld [vmem:[#allocation5 + $0x660] sm:$0xff]
    %v251 = vld [vmem:[#allocation5 + $0x668] sm:$0xff]
    %v252 = vld [vmem:[#allocation5 + $0x670] sm:$0xff]
    %v253 = vld [vmem:[#allocation5 + $0x678] sm:$0xff]
    %v254 = vld [vmem:[#allocation5 + $0x680] sm:$0xff]
    %v255 = vld [vmem:[#allocation5 + $0x688] sm:$0xff]
    %v256 = vld [vmem:[#allocation5 + $0x690] sm:$0xff]
    %v257 = vld [vmem:[#allocation5 + $0x698] sm:$0xff]
    %v258 = vld [vmem:[#allocation5 + $0x6a0] sm:$0xff]
    %v259 = vld [vmem:[#allocation5 + $0x6a8] sm:$0xff]
    %v260 = vld [vmem:[#allocation5 + $0x6b0] sm:$0xff]
    %v261 = vld [vmem:[#allocation5 + $0x6b8] sm:$0xff]
    %v262 = vld [vmem:[%s2] sm:$0x7]
    %v264 = vlaneseq
    %v265 = vshrl.u32 %v264, 7
    %v266 = vsub.s32 0, %v265
    %v267 = vrot.slane %v262, %v266
    %v268 = vlaneseq
    %v269 = vshrl.u32 %v268, 7
    %v270 = vsub.s32 1, %v269
    %v271 = vrot.slane %v262, %v270
    %v272 = vlaneseq
    %v273 = vshrl.u32 %v272, 7
    %v274 = vsub.s32 2, %v273
    %v275 = vrot.slane %v262, %v274
    %vm279 = vcmask 523264
    %v281 = vsel %vm279, %v45, 0
    %283 = vmatprep.subr.mxu0 %v47
    %284 = vmatpush1.msra.mxu0 %v46
    %285 = vmatprep.subr.mxu0 %v50
    %286 = vmatpush1.msra.mxu0 %v49
    %287 = vmatprep.subr.mxu0 %v53
    %288 = vmatpush1.msra.mxu0 %v52
    %289 = vmatprep.subr.mxu0 %v56
    %290 = vmatpush1.msra.mxu0 %v55
    %291 = vmatprep.subr.mxu0 %v59
    %292 = vmatpush1.msra.mxu0 %v58
    %293 = vmatprep.subr.mxu0 %v62
    %294 = vmatpush1.msra.mxu0 %v61
    %295 = vmatprep.subr.mxu0 %v65
    %296 = vmatpush1.msra.mxu0 %v64
    %297 = vmatprep.subr.mxu0 %v68
    %298 = vmatpush1.msra.mxu0 %v67
    %299 = vmatprep.subr.mxu0 %v71
    %300 = vmatpush1.msra.mxu0 %v70
    %301 = vmatprep.subr.mxu0 %v74
    %302 = vmatpush1.msra.mxu0 %v73
    %303 = vmatprep.subr.mxu0 %v77
    %304 = vmatpush1.msra.mxu0 %v76
    %305 = vmatprep.subr.mxu0 %v80
    %306 = vmatpush1.msra.mxu0 %v79
    %307 = vmatprep.subr.mxu0 %v83
    %308 = vmatpush1.msra.mxu0 %v82
    %309 = vmatprep.subr.mxu0 %v86
    %310 = vmatpush1.msra.mxu0 %v85
    %311 = vmatprep.subr.mxu0 %v89
    %312 = vmatpush1.msra.mxu0 %v88
    %313 = vmatprep.subr.mxu0 %v92
    %314 = vmatpush1.msra.mxu0 %v91
    %315 = vmatprep.subr.mxu0 %v95
    %316 = vmatpush1.msra.mxu0 %v94
    %317 = vmatprep.subr.mxu0 %v98
    %318 = vmatpush1.msra.mxu0 %v97
    %319 = vmatprep.subr.mxu0 %v101
    %320 = vmatpush1.msra.mxu0 %v100
    %321 = vmatprep.subr.mxu0 %v104
    %322 = vmatpush1.msra.mxu0 %v103
    %323 = vmatprep.subr.mxu0 %v107
    %324 = vmatpush1.msra.mxu0 %v106
    %325 = vmatprep.subr.mxu0 %v110
    %326 = vmatpush1.msra.mxu0 %v109
    %327 = vmatprep.subr.mxu0 %v113
    %328 = vmatpush1.msra.mxu0 %v112
    %329 = vmatprep.subr.mxu0 %v116
    %330 = vmatpush1.msra.mxu0 %v115
    %331 = vmatprep.subr.mxu0 %v119
    %332 = vmatpush1.msra.mxu0 %v118
    %333 = vmatprep.subr.mxu0 %v122
    %334 = vmatpush1.msra.mxu0 %v121
    %335 = vmatprep.subr.mxu0 %v125
    %336 = vmatpush1.msra.mxu0 %v124
    %337 = vmatprep.subr.mxu0 %v128
    %338 = vmatpush1.msra.mxu0 %v127
    %339 = vmatprep.subr.mxu0 %v131
    %340 = vmatpush1.msra.mxu0 %v130
    %341 = vmatprep.subr.mxu0 %v134
    %342 = vmatpush1.msra.mxu0 %v133
    %343 = vmatprep.subr.mxu0 %v137
    %344 = vmatpush1.msra.mxu0 %v136
    %345 = vmatprep.subr.mxu0 %v140
    %346 = vmatpush1.msra.mxu0 %v139
    %347 = vmatprep.mubr.f32.mxu0 %v42
    %348 = vmatmul.mubr.f32.gmra.mrb[0].mxu0 %v41
    %v349 = vpop.f32.mrb[0].mxu0
    %v350 = vadd.f32 %v267, %v349
    %v351 = vpop.f32.mrb[0].mxu0
    %v352 = vadd.f32 %v271, %v351
    %353 = vdwg.mxu0
    %354 = vmatprep.subr.mxu0 %v143
    %355 = vmatpush1.msra.mxu0 %v142
    %356 = vmatprep.subr.mxu0 %v146
    %357 = vmatpush1.msra.mxu0 %v145
    %358 = vmatprep.subr.mxu0 %v149
    %359 = vmatpush1.msra.mxu0 %v148
    %360 = vmatprep.subr.mxu0 %v152
    %361 = vmatpush1.msra.mxu0 %v151
    %362 = vmatprep.subr.mxu0 %v155
    %363 = vmatpush1.msra.mxu0 %v154
    %364 = vmatprep.subr.mxu0 %v158
    %365 = vmatpush1.msra.mxu0 %v157
    %366 = vmatprep.subr.mxu0 %v161
    %367 = vmatpush1.msra.mxu0 %v160
    %368 = vmatprep.subr.mxu0 %v164
    %369 = vmatpush1.msra.mxu0 %v163
    %370 = vmatprep.subr.mxu0 %v167
    %371 = vmatpush1.msra.mxu0 %v166
    %372 = vmatprep.subr.mxu0 %v170
    %373 = vmatpush1.msra.mxu0 %v169
    %374 = vmatprep.subr.mxu0 %v173
    %375 = vmatpush1.msra.mxu0 %v172
    %376 = vmatprep.subr.mxu0 %v176
    %377 = vmatpush1.msra.mxu0 %v175
    %378 = vmatprep.subr.mxu0 %v179
    %379 = vmatpush1.msra.mxu0 %v178
    %380 = vmatprep.subr.mxu0 %v182
    %381 = vmatpush1.msra.mxu0 %v181
    %382 = vmatprep.subr.mxu0 %v185
    %383 = vmatpush1.msra.mxu0 %v184
    %384 = vmatprep.subr.mxu0 %v188
    %385 = vmatpush1.msra.mxu0 %v187
    %386 = vmatprep.subr.mxu0 %v191
    %387 = vmatpush1.msra.mxu0 %v190
    %388 = vmatprep.subr.mxu0 %v194
    %389 = vmatpush1.msra.mxu0 %v193
    %390 = vmatprep.subr.mxu0 %v197
    %391 = vmatpush1.msra.mxu0 %v196
    %392 = vmatprep.subr.mxu0 %v200
    %393 = vmatpush1.msra.mxu0 %v199
    %394 = vmatprep.subr.mxu0 %v203
    %395 = vmatpush1.msra.mxu0 %v202
    %396 = vmatprep.subr.mxu0 %v206
    %397 = vmatpush1.msra.mxu0 %v205
    %398 = vmatprep.subr.mxu0 %v209
    %399 = vmatpush1.msra.mxu0 %v208
    %400 = vmatprep.subr.mxu0 %v212
    %401 = vmatpush1.msra.mxu0 %v211
    %402 = vmatprep.subr.mxu0 %v215
    %403 = vmatpush1.msra.mxu0 %v214
    %404 = vmatprep.subr.mxu0 %v218
    %405 = vmatpush1.msra.mxu0 %v217
    %406 = vmatprep.subr.mxu0 %v221
    %407 = vmatpush1.msra.mxu0 %v220
    %408 = vmatprep.subr.mxu0 %v224
    %409 = vmatpush1.msra.mxu0 %v223
    %410 = vmatprep.subr.mxu0 %v227
    %411 = vmatpush1.msra.mxu0 %v226
    %412 = vmatprep.subr.mxu0 %v230
    %413 = vmatpush1.msra.mxu0 %v229
    %414 = vmatprep.subr.mxu0 %v233
    %415 = vmatpush1.msra.mxu0 %v232
    %416 = vmatprep.subr.mxu0 %v236
    %417 = vmatpush1.msra.mxu0 %v235
    %418 = vmatprep.mubr.f32.mxu0 %v44
    %419 = vmatmul.mubr.f32.gmra.mrb[0].mxu0 %v43
    %v420 = vpop.f32.mrb[0].mxu0
    %v421 = vadd.f32 %v350, %v420
    %v422 = vpop.f32.mrb[0].mxu0
    %v423 = vadd.f32 %v352, %v422
    %424 = vdwg.mxu0
    %425 = vmatprep.subr.mxu0 %v239
    %426 = vmatpush1.msra.mxu0 %v238
    %427 = vmatprep.subr.mxu0 %v242
    %428 = vmatpush1.msra.mxu0 %v241
    %429 = vmatprep.subr.mxu0 %v245
    %430 = vmatpush1.msra.mxu0 %v244
    %431 = vmatprep.subr.mxu0 %v248
    %432 = vmatpush1.msra.mxu0 %v247
    %433 = vmatprep.subr.mxu0 %v251
    %434 = vmatpush1.msra.mxu0 %v250
    %435 = vmatprep.subr.mxu0 %v254
    %436 = vmatpush1.msra.mxu0 %v253
    %437 = vmatprep.subr.mxu0 %v257
    %438 = vmatpush1.msra.mxu0 %v256
    %439 = vmatprep.subr.mxu0 %v260
    %440 = vmatpush1.msra.mxu0 %v259
    %441 = vmatprep.subr.mxu0 0.0
    %442 = vmatpush1.msra.mxu0 0.0
    %443 = vmatprep.subr.mxu0 0.0
    %444 = vmatpush1.msra.mxu0 0.0
    %445 = vmatprep.subr.mxu0 0.0
    %446 = vmatpush1.msra.mxu0 0.0
    %447 = vmatprep.subr.mxu0 0.0
    %448 = vmatpush1.msra.mxu0 0.0
    %449 = vmatprep.subr.mxu0 0.0
    %450 = vmatpush1.msra.mxu0 0.0
    %451 = vmatprep.subr.mxu0 0.0
    %452 = vmatpush1.msra.mxu0 0.0
    %453 = vmatprep.subr.mxu0 0.0
    %454 = vmatpush1.msra.mxu0 0.0
    %455 = vmatprep.subr.mxu0 0.0
    %456 = vmatpush1.msra.mxu0 0.0
    %457 = vmatprep.subr.mxu0 0.0
    %458 = vmatpush1.msra.mxu0 0.0
    %459 = vmatprep.subr.mxu0 0.0
    %460 = vmatpush1.msra.mxu0 0.0
    %461 = vmatprep.subr.mxu0 0.0
    %462 = vmatpush1.msra.mxu0 0.0
    %463 = vmatprep.subr.mxu0 0.0
    %464 = vmatpush1.msra.mxu0 0.0
    %465 = vmatprep.subr.mxu0 0.0
    %466 = vmatpush1.msra.mxu0 0.0
    %467 = vmatprep.subr.mxu0 0.0
    %468 = vmatpush1.msra.mxu0 0.0
    %469 = vmatprep.subr.mxu0 0.0
    %470 = vmatpush1.msra.mxu0 0.0
    %471 = vmatprep.subr.mxu0 0.0
    %472 = vmatpush1.msra.mxu0 0.0
    %473 = vmatprep.subr.mxu0 0.0
    %474 = vmatpush1.msra.mxu0 0.0
    %475 = vmatprep.subr.mxu0 0.0
    %476 = vmatpush1.msra.mxu0 0.0
    %477 = vmatprep.subr.mxu0 0.0
    %478 = vmatpush1.msra.mxu0 0.0
    %479 = vmatprep.subr.mxu0 0.0
    %480 = vmatpush1.msra.mxu0 0.0
    %481 = vmatprep.subr.mxu0 0.0
    %482 = vmatpush1.msra.mxu0 0.0
    %483 = vmatprep.subr.mxu0 0.0
    %484 = vmatpush1.msra.mxu0 0.0
    %485 = vmatprep.subr.mxu0 0.0
    %486 = vmatpush1.msra.mxu0 0.0
    %487 = vmatprep.subr.mxu0 0.0
    %488 = vmatpush1.msra.mxu0 0.0
    %489 = vmatprep.mubr.f32.mxu0 0.0
    %490 = vmatmul.mubr.f32.gmra.mrb[0].mxu0 %v281
    %v491 = vpop.f32.mrb[0].mxu0
    %v492 = vadd.f32 %v421, %v491
    %v493 = vpop.f32.mrb[0].mxu0
    %v494 = vadd.f32 %v423, %v493
    %495 = vdwg.mxu0
    %496 = vmatprep.subr.mxu0 0.0
    %497 = vmatpush1.msra.mxu0 %v48
    %498 = vmatprep.subr.mxu0 0.0
    %499 = vmatpush1.msra.mxu0 %v51
    %500 = vmatprep.subr.mxu0 0.0
    %501 = vmatpush1.msra.mxu0 %v54
    %502 = vmatprep.subr.mxu0 0.0
    %503 = vmatpush1.msra.mxu0 %v57
    %504 = vmatprep.subr.mxu0 0.0
    %505 = vmatpush1.msra.mxu0 %v60
    %506 = vmatprep.subr.mxu0 0.0
    %507 = vmatpush1.msra.mxu0 %v63
    %508 = vmatprep.subr.mxu0 0.0
    %509 = vmatpush1.msra.mxu0 %v66
    %510 = vmatprep.subr.mxu0 0.0
    %511 = vmatpush1.msra.mxu0 %v69
    %512 = vmatprep.subr.mxu0 0.0
    %513 = vmatpush1.msra.mxu0 %v72
    %514 = vmatprep.subr.mxu0 0.0
    %515 = vmatpush1.msra.mxu0 %v75
    %516 = vmatprep.subr.mxu0 0.0
    %517 = vmatpush1.msra.mxu0 %v78
    %518 = vmatprep.subr.mxu0 0.0
    %519 = vmatpush1.msra.mxu0 %v81
    %520 = vmatprep.subr.mxu0 0.0
    %521 = vmatpush1.msra.mxu0 %v84
    %522 = vmatprep.subr.mxu0 0.0
    %523 = vmatpush1.msra.mxu0 %v87
    %524 = vmatprep.subr.mxu0 0.0
    %525 = vmatpush1.msra.mxu0 %v90
    %526 = vmatprep.subr.mxu0 0.0
    %527 = vmatpush1.msra.mxu0 %v93
    %528 = vmatprep.subr.mxu0 0.0
    %529 = vmatpush1.msra.mxu0 %v96
    %530 = vmatprep.subr.mxu0 0.0
    %531 = vmatpush1.msra.mxu0 %v99
    %532 = vmatprep.subr.mxu0 0.0
    %533 = vmatpush1.msra.mxu0 %v102
    %534 = vmatprep.subr.mxu0 0.0
    %535 = vmatpush1.msra.mxu0 %v105
    %536 = vmatprep.subr.mxu0 0.0
    %537 = vmatpush1.msra.mxu0 %v108
    %538 = vmatprep.subr.mxu0 0.0
    %539 = vmatpush1.msra.mxu0 %v111
    %540 = vmatprep.subr.mxu0 0.0
    %541 = vmatpush1.msra.mxu0 %v114
    %542 = vmatprep.subr.mxu0 0.0
    %543 = vmatpush1.msra.mxu0 %v117
    %544 = vmatprep.subr.mxu0 0.0
    %545 = vmatpush1.msra.mxu0 %v120
    %546 = vmatprep.subr.mxu0 0.0
    %547 = vmatpush1.msra.mxu0 %v123
    %548 = vmatprep.subr.mxu0 0.0
    %549 = vmatpush1.msra.mxu0 %v126
    %550 = vmatprep.subr.mxu0 0.0
    %551 = vmatpush1.msra.mxu0 %v129
    %552 = vmatprep.subr.mxu0 0.0
    %553 = vmatpush1.msra.mxu0 %v132
    %554 = vmatprep.subr.mxu0 0.0
    %555 = vmatpush1.msra.mxu0 %v135
    %556 = vmatprep.subr.mxu0 0.0
    %557 = vmatpush1.msra.mxu0 %v138
    %558 = vmatprep.subr.mxu0 0.0
    %559 = vmatpush1.msra.mxu0 %v141
    %560 = vmatprep.mubr.f32.mxu0 %v42
    %561 = vmatmul.mubr.f32.gmra.mrb[0].mxu0 %v41
    %v562 = vpop.f32.mrb[0].mxu0
    %v563 = vadd.f32 %v275, %v562
    %v564 = vpop.f32.mrb[0].mxu0
    %565 = vdwg.mxu0
    %566 = vmatprep.subr.mxu0 0.0
    %567 = vmatpush1.msra.mxu0 %v144
    %568 = vmatprep.subr.mxu0 0.0
    %569 = vmatpush1.msra.mxu0 %v147
    %570 = vmatprep.subr.mxu0 0.0
    %571 = vmatpush1.msra.mxu0 %v150
    %572 = vmatprep.subr.mxu0 0.0
    %573 = vmatpush1.msra.mxu0 %v153
    %574 = vmatprep.subr.mxu0 0.0
    %575 = vmatpush1.msra.mxu0 %v156
    %576 = vmatprep.subr.mxu0 0.0
    %577 = vmatpush1.msra.mxu0 %v159
    %578 = vmatprep.subr.mxu0 0.0
    %579 = vmatpush1.msra.mxu0 %v162
    %580 = vmatprep.subr.mxu0 0.0
    %581 = vmatpush1.msra.mxu0 %v165
    %582 = vmatprep.subr.mxu0 0.0
    %583 = vmatpush1.msra.mxu0 %v168
    %584 = vmatprep.subr.mxu0 0.0
    %585 = vmatpush1.msra.mxu0 %v171
    %586 = vmatprep.subr.mxu0 0.0
    %587 = vmatpush1.msra.mxu0 %v174
    %588 = vmatprep.subr.mxu0 0.0
    %589 = vmatpush1.msra.mxu0 %v177
    %590 = vmatprep.subr.mxu0 0.0
    %591 = vmatpush1.msra.mxu0 %v180
    %592 = vmatprep.subr.mxu0 0.0
    %593 = vmatpush1.msra.mxu0 %v183
    %594 = vmatprep.subr.mxu0 0.0
    %595 = vmatpush1.msra.mxu0 %v186
    %596 = vmatprep.subr.mxu0 0.0
    %597 = vmatpush1.msra.mxu0 %v189
    %598 = vmatprep.subr.mxu0 0.0
    %599 = vmatpush1.msra.mxu0 %v192
    %600 = vmatprep.subr.mxu0 0.0
    %601 = vmatpush1.msra.mxu0 %v195
    %602 = vmatprep.subr.mxu0 0.0
    %603 = vmatpush1.msra.mxu0 %v198
    %604 = vmatprep.subr.mxu0 0.0
    %605 = vmatpush1.msra.mxu0 %v201
    %606 = vmatprep.subr.mxu0 0.0
    %607 = vmatpush1.msra.mxu0 %v204
    %608 = vmatprep.subr.mxu0 0.0
    %609 = vmatpush1.msra.mxu0 %v207
    %610 = vmatprep.subr.mxu0 0.0
    %611 = vmatpush1.msra.mxu0 %v210
    %612 = vmatprep.subr.mxu0 0.0
    %613 = vmatpush1.msra.mxu0 %v213
    %614 = vmatprep.subr.mxu0 0.0
    %615 = vmatpush1.msra.mxu0 %v216
    %616 = vmatprep.subr.mxu0 0.0
    %617 = vmatpush1.msra.mxu0 %v219
    %618 = vmatprep.subr.mxu0 0.0
    %619 = vmatpush1.msra.mxu0 %v222
    %620 = vmatprep.subr.mxu0 0.0
    %621 = vmatpush1.msra.mxu0 %v225
    %622 = vmatprep.subr.mxu0 0.0
    %623 = vmatpush1.msra.mxu0 %v228
    %624 = vmatprep.subr.mxu0 0.0
    %625 = vmatpush1.msra.mxu0 %v231
    %626 = vmatprep.subr.mxu0 0.0
    %627 = vmatpush1.msra.mxu0 %v234
    %628 = vmatprep.subr.mxu0 0.0
    %629 = vmatpush1.msra.mxu0 %v237
    %630 = vmatprep.mubr.f32.mxu0 %v44
    %631 = vmatmul.mubr.f32.gmra.mrb[0].mxu0 %v43
    %v632 = vpop.f32.mrb[0].mxu0
    %v633 = vadd.f32 %v563, %v632
    %v634 = vpop.f32.mrb[0].mxu0
    %635 = vdwg.mxu0
    %636 = vmatprep.subr.mxu0 0.0
    %637 = vmatpush1.msra.mxu0 %v240
    %638 = vmatprep.subr.mxu0 0.0
    %639 = vmatpush1.msra.mxu0 %v243
    %640 = vmatprep.subr.mxu0 0.0
    %641 = vmatpush1.msra.mxu0 %v246
    %642 = vmatprep.subr.mxu0 0.0
    %643 = vmatpush1.msra.mxu0 %v249
    %644 = vmatprep.subr.mxu0 0.0
    %645 = vmatpush1.msra.mxu0 %v252
    %646 = vmatprep.subr.mxu0 0.0
    %647 = vmatpush1.msra.mxu0 %v255
    %648 = vmatprep.subr.mxu0 0.0
    %649 = vmatpush1.msra.mxu0 %v258
    %650 = vmatprep.subr.mxu0 0.0
    %651 = vmatpush1.msra.mxu0 %v261
    %652 = vmatprep.subr.mxu0 0.0
    %653 = vmatpush1.msra.mxu0 0.0
    %654 = vmatprep.subr.mxu0 0.0
    %655 = vmatpush1.msra.mxu0 0.0
    %656 = vmatprep.subr.mxu0 0.0
    %657 = vmatpush1.msra.mxu0 0.0
    %658 = vmatprep.subr.mxu0 0.0
    %659 = vmatpush1.msra.mxu0 0.0
    %660 = vmatprep.subr.mxu0 0.0
    %661 = vmatpush1.msra.mxu0 0.0
    %662 = vmatprep.subr.mxu0 0.0
    %663 = vmatpush1.msra.mxu0 0.0
    %664 = vmatprep.subr.mxu0 0.0
    %665 = vmatpush1.msra.mxu0 0.0
    %666 = vmatprep.subr.mxu0 0.0
    %667 = vmatpush1.msra.mxu0 0.0
    %668 = vmatprep.subr.mxu0 0.0
    %669 = vmatpush1.msra.mxu0 0.0
    %670 = vmatprep.subr.mxu0 0.0
    %671 = vmatpush1.msra.mxu0 0.0
    %672 = vmatprep.subr.mxu0 0.0
    %673 = vmatpush1.msra.mxu0 0.0
    %674 = vmatprep.subr.mxu0 0.0
    %675 = vmatpush1.msra.mxu0 0.0
    %676 = vmatprep.subr.mxu0 0.0
    %677 = vmatpush1.msra.mxu0 0.0
    %678 = vmatprep.subr.mxu0 0.0
    %679 = vmatpush1.msra.mxu0 0.0
    %680 = vmatprep.subr.mxu0 0.0
    %681 = vmatpush1.msra.mxu0 0.0
    %682 = vmatprep.subr.mxu0 0.0
    %683 = vmatpush1.msra.mxu0 0.0
    %684 = vmatprep.subr.mxu0 0.0
    %685 = vmatpush1.msra.mxu0 0.0
    %686 = vmatprep.subr.mxu0 0.0
    %687 = vmatpush1.msra.mxu0 0.0
    %688 = vmatprep.subr.mxu0 0.0
    %689 = vmatpush1.msra.mxu0 0.0
    %690 = vmatprep.subr.mxu0 0.0
    %691 = vmatpush1.msra.mxu0 0.0
    %692 = vmatprep.subr.mxu0 0.0
    %693 = vmatpush1.msra.mxu0 0.0
    %694 = vmatprep.subr.mxu0 0.0
    %695 = vmatpush1.msra.mxu0 0.0
    %696 = vmatprep.subr.mxu0 0.0
    %697 = vmatpush1.msra.mxu0 0.0
    %698 = vmatprep.subr.mxu0 0.0
    %699 = vmatpush1.msra.mxu0 0.0
    %700 = vmatprep.mubr.f32.mxu0 0.0
    %701 = vmatmul.mubr.f32.gmra.mrb[0].mxu0 %v281
    %v702 = vpop.f32.mrb[0].mxu0
    %v703 = vadd.f32 %v633, %v702
    %v704 = vpop.f32.mrb[0].mxu0
    %705 = vdwg.mxu0
    %706 = vst [vmem:[#allocation7] sm:$0xff] %v492
    %707 = vst [vmem:[#allocation7 + $0x8] sm:$0xff] %v494
    %708 = vst [vmem:[#allocation7 + $0x10] sm:$0xff] %v703
    // Predicated region
    $region22: #{tpu_custom_call.1} parent=1 // pred_check
      _
    $region23: #{tpu_custom_call.1} parent=1 // pred_check_branch
      %710 = sbr.rel (0) target = $region25
    $region24: #{tpu_custom_call.1} parent=1 // pred_region
      %s712 = ssub.s32 384, 384
      %713 = vsyncadd [#allocation4], %s712
      %s715 = sshll.u32 [#allocation7], 4
      %s716 = int_to_ptr.vmem [resolvable:$true] %s715
      %718 = dma.vmem_to_hbm [thread:$0]  %s716, 384, %s3, [#allocation4]
    $region25: #{tpu_custom_call.1} parent=1 // pred_fallthru
      _
    // Predicated region
    $region26: #{tpu_custom_call.1} parent=1 // pred_check
      _
    $region27: #{tpu_custom_call.1} parent=1 // pred_check_branch
      %720 = sbr.rel (0) target = $region29
    $region28: #{tpu_custom_call.1} parent=1 // pred_region
      %721 = dma.done [#allocation4], 384
    $region29: #{tpu_custom_call.1} parent=1 // pred_fallthru
      _
    %722 = vsyncpa [#allocation3], 1
    %723 = vsyncpa [#allocation6], 1
    %724 = vsyncpa [#allocation4], 1

</llo_original>
